<compile_context>
chip_gen: v6e
topology: v6e:2x2x1
jax: 0.10.0
libtpu: 0.0.40
codegen_flags: <defaults>
</compile_context>

<pallas_src>
import jax
import jax.numpy as jnp
from jax.experimental import pallas as pl
from jax.experimental.pallas import tpu as pltpu

LN_EPS = 1e-5


def concat_mlp_kernel(self_ref, cross_ref, g_s_ref, g_c_ref, bt_s_ref, bt_c_ref,
                      w_s_ref, w_c_ref, bias_ref, out_ref, feat_ref):
    d_self = self_ref.shape[-1]
    d_cross = cross_ref.shape[-1]
    inv_d = 1.0 / float(d_self + d_cross)

    # Write the two pieces straight into the concatenated feature output
    # (no jnp.concatenate -> no extra (TB, 3*dim) VMEM temporary / extra pass).
    feat_ref[:, :d_self] = self_ref[...].astype(feat_ref.dtype)
    feat_ref[:, d_self:] = cross_ref[...].astype(feat_ref.dtype)

    x_s = self_ref[...].astype(jnp.float32)
    x_c = cross_ref[...].astype(jnp.float32)

    # Fused single-sweep LayerNorm stats from partial sums over both pieces.
    s = jnp.sum(x_s, axis=-1, keepdims=True) + jnp.sum(x_c, axis=-1, keepdims=True)
    sq = (jnp.sum(x_s * x_s, axis=-1, keepdims=True)
          + jnp.sum(x_c * x_c, axis=-1, keepdims=True))
    mean = s * inv_d
    var = jnp.maximum(sq * inv_d - mean * mean, 0.0)
    inv = jax.lax.rsqrt(var + LN_EPS)

    y_s = (x_s - mean) * inv * g_s_ref[...] + bt_s_ref[...]
    y_c = (x_c - mean) * inv * g_c_ref[...] + bt_c_ref[...]

    # Linear(3*dim -> CP) split over the two pieces; CP is lane-dense (>=128).
    out = (jnp.dot(y_s, w_s_ref[...], preferred_element_type=jnp.float32)
           + jnp.dot(y_c, w_c_ref[...], preferred_element_type=jnp.float32)
           + bias_ref[...])
    out_ref[...] = out.astype(out_ref.dtype)


def concat_mlp(self_feat, cross_feat, gamma, beta, w, b, *, block_rows=512):
    B, d_self = self_feat.shape
    d_cross = cross_feat.shape[-1]
    D = d_self + d_cross                      # == 3 * dim
    C = w.shape[-1]                           # num_classes
    CP = max(128, ((C + 127) // 128) * 128)   # lane-dense padded logits width

    # Row tile: biggest that fits comfortably in VMEM; full batch if small.
    TB = min(block_rows, B)
    grid = (pl.cdiv(B, TB),)

    # Pre-split params in the wrapper (plain JAX) so the kernel never slices
    # across the concat boundary.
    g_s = gamma[:d_self].reshape(1, d_self)
    g_c = gamma[d_self:].reshape(1, d_cross)
    bt_s = beta[:d_self].reshape(1, d_self)
    bt_c = beta[d_self:].reshape(1, d_cross)
    w_pad = jnp.zeros((D, CP), w.dtype).at[:, :C].set(w)
    w_s = w_pad[:d_self]
    w_c = w_pad[d_self:]
    bias = jnp.zeros((1, CP), b.dtype).at[:, :C].set(b.reshape(1, C))

    out_padded, feat = pl.pallas_call(
        concat_mlp_kernel,
        out_shape=(
            jax.ShapeDtypeStruct((B, CP), self_feat.dtype),  # padded logits
            jax.ShapeDtypeStruct((B, D), self_feat.dtype),   # concatenated feat
        ),
        grid=grid,
        in_specs=[
            pl.BlockSpec((TB, d_self), lambda i: (i, 0)),
            pl.BlockSpec((TB, d_cross), lambda i: (i, 0)),
            pl.BlockSpec((1, d_self), lambda i: (0, 0)),    # gamma_self (resident)
            pl.BlockSpec((1, d_cross), lambda i: (0, 0)),   # gamma_cross
            pl.BlockSpec((1, d_self), lambda i: (0, 0)),    # beta_self
            pl.BlockSpec((1, d_cross), lambda i: (0, 0)),   # beta_cross
            pl.BlockSpec((d_self, CP), lambda i: (0, 0)),   # w_self
            pl.BlockSpec((d_cross, CP), lambda i: (0, 0)),  # w_cross
            pl.BlockSpec((1, CP), lambda i: (0, 0)),        # bias
        ],
        out_specs=(
            pl.BlockSpec((TB, CP), lambda i: (i, 0)),
            pl.BlockSpec((TB, D), lambda i: (i, 0)),
        ),
        compiler_params=pltpu.CompilerParams(
            dimension_semantics=("parallel",)),
    )(self_feat, cross_feat, g_s, g_c, bt_s, bt_c, w_s, w_c, bias)

    return out_padded[:, :C], feat


def reference(self_feat, cross_feat, gamma, beta, w, b):
    feat = jnp.concatenate([self_feat, cross_feat], axis=-1).astype(jnp.float32)
    mean = jnp.mean(feat, axis=-1, keepdims=True)
    var = jnp.mean((feat - mean) ** 2, axis=-1, keepdims=True)
    y = (feat - mean) * jax.lax.rsqrt(var + LN_EPS) * gamma + beta
    return y @ w + b, feat


if __name__ == "__main__":
    # Small shapes consistent with the module: dim=128, num_classes=2, batch=16
    dim = 128
    num_classes = 2
    B = 16
    D = 3 * dim

    key = jax.random.PRNGKey(0)
    k1, k2, k3, k4 = jax.random.split(key, 4)

    # Inputs: cat(self_feat, cross_feat) must have last dim == 3*dim
    self_feat = jax.random.normal(k1, (B, dim), dtype=jnp.float32)
    cross_feat = jax.random.normal(k2, (B, 2 * dim), dtype=jnp.float32)

    # mlp_head params (deterministic, PyTorch-style init)
    gamma = jnp.ones((D,), dtype=jnp.float32)            # LayerNorm weight
    beta = jnp.zeros((D,), dtype=jnp.float32)            # LayerNorm bias
    bound = 1.0 / (D ** 0.5)
    w = jax.random.uniform(k3, (D, num_classes), jnp.float32, -bound, bound)
    b = jax.random.uniform(k4, (num_classes,), jnp.float32, -bound, bound)

    out, feat = concat_mlp(self_feat, cross_feat, gamma, beta, w, b)
    out = jax.block_until_ready(out)
    feat = jax.block_until_ready(feat)

    out_ref, feat_ref = reference(self_feat, cross_feat, gamma, beta, w, b)
    assert out.shape == (B, num_classes)
    assert feat.shape == (B, D)
    assert jnp.allclose(out, out_ref, atol=1e-4, rtol=1e-4)
    assert jnp.allclose(feat, feat_ref, atol=1e-5, rtol=1e-5)

    print("KERNEL_OK")
</pallas_src>

<mosaic_0001>
module attributes {stable_mosaic.version = 11 : i64} {
  func.func @concat_mlp_kernel(%arg0: i32, %arg1: memref<16x128xf32, #tpu.memory_space<vmem>>, %arg2: memref<16x256xf32, #tpu.memory_space<vmem>>, %arg3: memref<1x128xf32, #tpu.memory_space<vmem>>, %arg4: memref<1x256xf32, #tpu.memory_space<vmem>>, %arg5: memref<1x128xf32, #tpu.memory_space<vmem>>, %arg6: memref<1x256xf32, #tpu.memory_space<vmem>>, %arg7: memref<128x128xf32, #tpu.memory_space<vmem>>, %arg8: memref<256x128xf32, #tpu.memory_space<vmem>>, %arg9: memref<1x128xf32, #tpu.memory_space<vmem>>, %arg10: memref<16x128xf32, #tpu.memory_space<vmem>>, %arg11: memref<16x384xf32, #tpu.memory_space<vmem>>) attributes {dimension_semantics = [#tpu.dimension_semantics<parallel>], iteration_bounds = array<i64: 1>, scalar_prefetch = 0 : i64, scratch_operands = 0 : i64, tpu.core_type = #tpu.core_type<tc>, window_params = [{transform_indices = @transform_0, window_bounds = array<i64: 16, 128>}, {transform_indices = @transform_1, window_bounds = array<i64: 16, 256>}, {pipeline_mode = #tpu.pipeline_mode<synchronous>, transform_indices = @transform_2, window_bounds = array<i64: 1, 128>}, {pipeline_mode = #tpu.pipeline_mode<synchronous>, transform_indices = @transform_3, window_bounds = array<i64: 1, 256>}, {pipeline_mode = #tpu.pipeline_mode<synchronous>, transform_indices = @transform_4, window_bounds = array<i64: 1, 128>}, {pipeline_mode = #tpu.pipeline_mode<synchronous>, transform_indices = @transform_5, window_bounds = array<i64: 1, 256>}, {pipeline_mode = #tpu.pipeline_mode<synchronous>, transform_indices = @transform_6, window_bounds = array<i64: 128, 128>}, {pipeline_mode = #tpu.pipeline_mode<synchronous>, transform_indices = @transform_7, window_bounds = array<i64: 256, 128>}, {pipeline_mode = #tpu.pipeline_mode<synchronous>, transform_indices = @transform_8, window_bounds = array<i64: 1, 128>}, {transform_indices = @transform_9, window_bounds = array<i64: 16, 128>}, {transform_indices = @transform_10, window_bounds = array<i64: 16, 384>}]} {
    %c0 = arith.constant 0 : index
    %c0_0 = arith.constant 0 : index
    %0 = vector.load %arg1[%c0, %c0_0] : memref<16x128xf32, #tpu.memory_space<vmem>>, vector<16x128xf32>
    %c0_1 = arith.constant 0 : index
    %c0_2 = arith.constant 0 : index
    %1 = vector.load %arg11[%c0_1, %c0_2] : memref<16x384xf32, #tpu.memory_space<vmem>>, vector<16x128xf32>
    tpu.vector_store %arg11[%c0_1, %c0_2], %0 {strides = array<i32>} : memref<16x384xf32, #tpu.memory_space<vmem>>, vector<16x128xf32>,
    %c0_3 = arith.constant 0 : index
    %c0_4 = arith.constant 0 : index
    %2 = vector.load %arg2[%c0_3, %c0_4] : memref<16x256xf32, #tpu.memory_space<vmem>>, vector<16x256xf32>
    %c0_5 = arith.constant 0 : index
    %c128 = arith.constant 128 : index
    %3 = vector.load %arg11[%c0_5, %c128] : memref<16x384xf32, #tpu.memory_space<vmem>>, vector<16x256xf32>
    tpu.vector_store %arg11[%c0_5, %c128], %2 {strides = array<i32>} : memref<16x384xf32, #tpu.memory_space<vmem>>, vector<16x256xf32>,
    %c0_6 = arith.constant 0 : index
    %c0_7 = arith.constant 0 : index
    %4 = vector.load %arg1[%c0_6, %c0_7] : memref<16x128xf32, #tpu.memory_space<vmem>>, vector<16x128xf32>
    %c0_8 = arith.constant 0 : index
    %c0_9 = arith.constant 0 : index
    %5 = vector.load %arg2[%c0_8, %c0_9] : memref<16x256xf32, #tpu.memory_space<vmem>>, vector<16x256xf32>
    %cst = arith.constant dense<0.000000e+00> : vector<16xf32>
    %6 = vector.multi_reduction <add>, %4, %cst [1] : vector<16x128xf32> to vector<16xf32>
    %7 = vector.shape_cast %6 : vector<16xf32> to vector<16x1xf32>
    %cst_10 = arith.constant dense<0.000000e+00> : vector<16xf32>
    %8 = vector.multi_reduction <add>, %5, %cst_10 [1] : vector<16x256xf32> to vector<16xf32>
    %9 = vector.shape_cast %8 : vector<16xf32> to vector<16x1xf32>
    %10 = arith.addf %7, %9 : vector<16x1xf32>
    %11 = arith.mulf %4, %4 : vector<16x128xf32>
    %cst_11 = arith.constant dense<0.000000e+00> : vector<16xf32>
    %12 = vector.multi_reduction <add>, %11, %cst_11 [1] : vector<16x128xf32> to vector<16xf32>
    %13 = vector.shape_cast %12 : vector<16xf32> to vector<16x1xf32>
    %14 = arith.mulf %5, %5 : vector<16x256xf32>
    %cst_12 = arith.constant dense<0.000000e+00> : vector<16xf32>
    %15 = vector.multi_reduction <add>, %14, %cst_12 [1] : vector<16x256xf32> to vector<16xf32>
    %16 = vector.shape_cast %15 : vector<16xf32> to vector<16x1xf32>
    %17 = arith.addf %13, %16 : vector<16x1xf32>
    %cst_13 = arith.constant 0.00260416674 : f32
    %18 = vector.broadcast %cst_13 : f32 to vector<16x1xf32>
    %19 = arith.mulf %10, %18 : vector<16x1xf32>
    %cst_14 = arith.constant 0.00260416674 : f32
    %20 = vector.broadcast %cst_14 : f32 to vector<16x1xf32>
    %21 = arith.mulf %17, %20 : vector<16x1xf32>
    %22 = arith.mulf %19, %19 : vector<16x1xf32>
    %23 = arith.subf %21, %22 : vector<16x1xf32>
    %cst_15 = arith.constant 0.000000e+00 : f32
    %24 = vector.broadcast %cst_15 : f32 to vector<16x1xf32>
    %25 = arith.maximumf %23, %24 : vector<16x1xf32>
    %cst_16 = arith.constant 9.99999974E-6 : f32
    %26 = vector.broadcast %cst_16 : f32 to vector<16x1xf32>
    %27 = arith.addf %25, %26 : vector<16x1xf32>
    %28 = math.rsqrt %27 : vector<16x1xf32>
    %29 = vector.broadcast %19 : vector<16x1xf32> to vector<16x128xf32>
    %30 = arith.subf %4, %29 : vector<16x128xf32>
    %31 = vector.broadcast %28 : vector<16x1xf32> to vector<16x128xf32>
    %32 = arith.mulf %30, %31 : vector<16x128xf32>
    %c0_17 = arith.constant 0 : index
    %c0_18 = arith.constant 0 : index
    %33 = vector.load %arg3[%c0_17, %c0_18] : memref<1x128xf32, #tpu.memory_space<vmem>>, vector<1x128xf32>
    %34 = vector.broadcast %33 : vector<1x128xf32> to vector<16x128xf32>
    %35 = arith.mulf %32, %34 : vector<16x128xf32>
    %c0_19 = arith.constant 0 : index
    %c0_20 = arith.constant 0 : index
    %36 = vector.load %arg5[%c0_19, %c0_20] : memref<1x128xf32, #tpu.memory_space<vmem>>, vector<1x128xf32>
    %37 = vector.broadcast %36 : vector<1x128xf32> to vector<16x128xf32>
    %38 = arith.addf %35, %37 : vector<16x128xf32>
    %39 = vector.broadcast %19 : vector<16x1xf32> to vector<16x256xf32>
    %40 = arith.subf %5, %39 : vector<16x256xf32>
    %41 = vector.broadcast %28 : vector<16x1xf32> to vector<16x256xf32>
    %42 = arith.mulf %40, %41 : vector<16x256xf32>
    %c0_21 = arith.constant 0 : index
    %c0_22 = arith.constant 0 : index
    %43 = vector.load %arg4[%c0_21, %c0_22] : memref<1x256xf32, #tpu.memory_space<vmem>>, vector<1x256xf32>
    %44 = vector.broadcast %43 : vector<1x256xf32> to vector<16x256xf32>
    %45 = arith.mulf %42, %44 : vector<16x256xf32>
    %c0_23 = arith.constant 0 : index
    %c0_24 = arith.constant 0 : index
    %46 = vector.load %arg6[%c0_23, %c0_24] : memref<1x256xf32, #tpu.memory_space<vmem>>, vector<1x256xf32>
    %47 = vector.broadcast %46 : vector<1x256xf32> to vector<16x256xf32>
    %48 = arith.addf %45, %47 : vector<16x256xf32>
    %c0_25 = arith.constant 0 : index
    %c0_26 = arith.constant 0 : index
    %49 = vector.load %arg7[%c0_25, %c0_26] : memref<128x128xf32, #tpu.memory_space<vmem>>, vector<128x128xf32>
    %cst_27 = arith.constant dense<0.000000e+00> : vector<16x128xf32>
    %50 = tpu.matmul %38, %49, %cst_27 {dimension_numbers = #tpu.dot_dimension_numbers<[1], [0], [0], [1], [0, 0, 1, 1], [], []>} : vector<16x128xf32>, vector<128x128xf32>, vector<16x128xf32> -> vector<16x128xf32>
    %c0_28 = arith.constant 0 : index
    %c0_29 = arith.constant 0 : index
    %51 = vector.load %arg8[%c0_28, %c0_29] : memref<256x128xf32, #tpu.memory_space<vmem>>, vector<256x128xf32>
    %cst_30 = arith.constant dense<0.000000e+00> : vector<16x128xf32>
    %52 = tpu.matmul %48, %51, %cst_30 {dimension_numbers = #tpu.dot_dimension_numbers<[1], [0], [0], [1], [0, 0, 1, 1], [], []>} : vector<16x256xf32>, vector<256x128xf32>, vector<16x128xf32> -> vector<16x128xf32>
    %53 = arith.addf %50, %52 : vector<16x128xf32>
    %c0_31 = arith.constant 0 : index
    %c0_32 = arith.constant 0 : index
    %54 = vector.load %arg9[%c0_31, %c0_32] : memref<1x128xf32, #tpu.memory_space<vmem>>, vector<1x128xf32>
    %55 = vector.broadcast %54 : vector<1x128xf32> to vector<16x128xf32>
    %56 = arith.addf %53, %55 : vector<16x128xf32>
    %c0_33 = arith.constant 0 : index
    %c0_34 = arith.constant 0 : index
    %57 = vector.load %arg10[%c0_33, %c0_34] : memref<16x128xf32, #tpu.memory_space<vmem>>, vector<16x128xf32>
    tpu.vector_store %arg10[%c0_33, %c0_34], %56 {strides = array<i32>} : memref<16x128xf32, #tpu.memory_space<vmem>>, vector<16x128xf32>,
    return
  }
  func.func @transform_0(%arg0: i32) -> (i32, i32) {
    %c0_i32 = arith.constant 0 : i32
    %c0_i32_0 = arith.constant 0 : i32
    return %arg0, %c0_i32 : i32, i32
  }
  func.func @transform_1(%arg0: i32) -> (i32, i32) {
    %c0_i32 = arith.constant 0 : i32
    %c0_i32_0 = arith.constant 0 : i32
    return %arg0, %c0_i32 : i32, i32
  }
  func.func @transform_2(%arg0: i32) -> (i32, i32) {
    %c0_i32 = arith.constant 0 : i32
    %c0_i32_0 = arith.constant 0 : i32
    %c0_i32_1 = arith.constant 0 : i32
    return %c0_i32, %c0_i32_0 : i32, i32
  }
  func.func @transform_3(%arg0: i32) -> (i32, i32) {
    %c0_i32 = arith.constant 0 : i32
    %c0_i32_0 = arith.constant 0 : i32
    %c0_i32_1 = arith.constant 0 : i32
    return %c0_i32, %c0_i32_0 : i32, i32
  }
  func.func @transform_4(%arg0: i32) -> (i32, i32) {
    %c0_i32 = arith.constant 0 : i32
    %c0_i32_0 = arith.constant 0 : i32
    %c0_i32_1 = arith.constant 0 : i32
    return %c0_i32, %c0_i32_0 : i32, i32
  }
  func.func @transform_5(%arg0: i32) -> (i32, i32) {
    %c0_i32 = arith.constant 0 : i32
    %c0_i32_0 = arith.constant 0 : i32
    %c0_i32_1 = arith.constant 0 : i32
    return %c0_i32, %c0_i32_0 : i32, i32
  }
  func.func @transform_6(%arg0: i32) -> (i32, i32) {
    %c0_i32 = arith.constant 0 : i32
    %c0_i32_0 = arith.constant 0 : i32
    %c0_i32_1 = arith.constant 0 : i32
    return %c0_i32, %c0_i32_0 : i32, i32
  }
  func.func @transform_7(%arg0: i32) -> (i32, i32) {
    %c0_i32 = arith.constant 0 : i32
    %c0_i32_0 = arith.constant 0 : i32
    %c0_i32_1 = arith.constant 0 : i32
    return %c0_i32, %c0_i32_0 : i32, i32
  }
  func.func @transform_8(%arg0: i32) -> (i32, i32) {
    %c0_i32 = arith.constant 0 : i32
    %c0_i32_0 = arith.constant 0 : i32
    %c0_i32_1 = arith.constant 0 : i32
    return %c0_i32, %c0_i32_0 : i32, i32
  }
  func.func @transform_9(%arg0: i32) -> (i32, i32) {
    %c0_i32 = arith.constant 0 : i32
    %c0_i32_0 = arith.constant 0 : i32
    return %arg0, %c0_i32 : i32, i32
  }
  func.func @transform_10(%arg0: i32) -> (i32, i32) {
    %c0_i32 = arith.constant 0 : i32
    %c0_i32_0 = arith.constant 0 : i32
    return %arg0, %c0_i32 : i32, i32
  }
}

</mosaic_0001>

<llo_original>
// kernel: tpu_custom_call.1
$region0: #{tpu_custom_call.1}
  #allocation0 [shape = 'u32[]', space=smem, size = 0x4, offset = 0x4, fixed_abs, tag = 'smem constant byte address 0x4 - core index']
  #allocation1 [shape = 'u32[144,128]{1,0:T(1,128)}', space=vmem, size = 0x12000, scoped, tag = 'internal scratch']
  %s0 = inlined_call_operand.hbm [shape: f32[16,128], index: 0, kind: input, shape index: {}]
  %s1 = inlined_call_operand.hbm [shape: f32[16,256], index: 1, kind: input, shape index: {}]
  %s2 = inlined_call_operand.vmem [shape: f32[1,128], index: 2, kind: input, shape index: {}]
  %s3 = inlined_call_operand.vmem [shape: f32[1,256], index: 3, kind: input, shape index: {}]
  %s4 = inlined_call_operand.vmem [shape: f32[1,128], index: 4, kind: input, shape index: {}]
  %s5 = inlined_call_operand.vmem [shape: f32[1,256], index: 5, kind: input, shape index: {}]
  %s6 = inlined_call_operand.hbm [shape: f32[128,128], index: 6, kind: input, shape index: {}]
  %s7 = inlined_call_operand.hbm [shape: f32[256,128], index: 7, kind: input, shape index: {}]
  %s8 = inlined_call_operand.vmem [shape: f32[1,128], index: 8, kind: input, shape index: {}]
  %s9 = inlined_call_operand.hbm [shape: f32[16,128], index: 9, kind: output, shape index: {0}]
  %s10 = inlined_call_operand.hbm [shape: f32[16,384], index: 10, kind: output, shape index: {1}]
  %11 = xla_tuple %s9, %s10
  %s12 = sld [smem:[#allocation0]]
  $region70: #{tpu_custom_call.1} parent=0
    _
  %s14 = ssub.s32 1, %s12
  %s15 = scalar_select 0, %s14, %s12
  $region1: #{tpu_custom_call.1} parent=0
    #allocation2 [shape = 'u8[8192]{0}', space=vmem, size = 0x2000, scoped, tag = 'input window, operand 0, single buffered']
    #allocation3 [shape = 's32[1]{0}', space=sflag, size = 0x4, scoped, tag = 'scoped memory for tpu_custom_call.1']
    #allocation4 [shape = 's32[1]{0}', space=sflag, size = 0x4, scoped, tag = 'scoped memory for tpu_custom_call.1']
    #allocation5 [shape = 'u8[16384]{0}', space=vmem, size = 0x4000, scoped, tag = 'input window, operand 1, single buffered']
    #allocation6 [shape = 's32[1]{0}', space=sflag, size = 0x4, scoped, tag = 'scoped memory for tpu_custom_call.1']
    #allocation7 [shape = 'u8[65536]{0}', space=vmem, size = 0x10000, scoped, tag = 'input window, operand 6, single buffered']
    #allocation8 [shape = 'u8[131072]{0}', space=vmem, size = 0x20000, scoped, tag = 'input window, operand 7, single buffered']
    #allocation9 [shape = 's32[1]{0}', space=sflag, size = 0x4, scoped, tag = 'scoped memory for tpu_custom_call.1']
    #allocation10 [shape = 'u8[8192]{0}', space=vmem, size = 0x2000, scoped, tag = 'output window, operand 0, single buffered']
    #allocation11 [shape = 'u8[24576]{0}', space=vmem, size = 0x6000, scoped, tag = 'output window, operand 1, single buffered']
    #allocation12 [shape = 's32[1]{0}', space=sflag, size = 0x4, scoped, tag = 'scoped memory for tpu_custom_call.1']
    %16 = vsyncpa [#allocation3], 0
    %17 = vsyncpa [#allocation6], 0
    %18 = vsyncpa [#allocation9], 0
    %19 = vsyncpa [#allocation4], 0
    %20 = vsyncpa [#allocation12], 0
    // Predicated region
    $region2: #{tpu_custom_call.1} parent=1 // pred_check
      _
    $region3: #{tpu_custom_call.1} parent=1 // pred_check_branch
      %22 = sbr.rel (0) target = $region5
    $region4: #{tpu_custom_call.1} parent=1 // pred_region
      %s24 = ssub.s32 256, 256
      %25 = vsyncadd [#allocation3], %s24
      %s26 = sshll.u32 [#allocation2], 4
      %s27 = int_to_ptr.vmem [resolvable:$true] %s26
      %32 = dma.hbm_to_vmem [thread:$0]  %s0, 256, %s27, [#allocation3], 128, 128, 8
    $region5: #{tpu_custom_call.1} parent=1 // pred_fallthru
      _
    // Predicated region
    $region6: #{tpu_custom_call.1} parent=1 // pred_check
      _
    $region7: #{tpu_custom_call.1} parent=1 // pred_check_branch
      %34 = sbr.rel (0) target = $region9
    $region8: #{tpu_custom_call.1} parent=1 // pred_region
      %s36 = ssub.s32 512, 512
      %37 = vsyncadd [#allocation6], %s36
      %s38 = sshll.u32 [#allocation5], 4
      %s39 = int_to_ptr.vmem [resolvable:$true] %s38
      %44 = dma.hbm_to_vmem [thread:$0]  %s1, 512, %s39, [#allocation6], 256, 256, 16
    $region9: #{tpu_custom_call.1} parent=1 // pred_fallthru
      _
    // Predicated region
    $region10: #{tpu_custom_call.1} parent=1 // pred_check
      _
    $region11: #{tpu_custom_call.1} parent=1 // pred_check_branch
      %46 = sbr.rel (0) target = $region13
    $region12: #{tpu_custom_call.1} parent=1 // pred_region
      _
    $region13: #{tpu_custom_call.1} parent=1 // pred_fallthru
      _
    // Predicated region
    $region14: #{tpu_custom_call.1} parent=1 // pred_check
      _
    $region15: #{tpu_custom_call.1} parent=1 // pred_check_branch
      %48 = sbr.rel (0) target = $region17
    $region16: #{tpu_custom_call.1} parent=1 // pred_region
      _
    $region17: #{tpu_custom_call.1} parent=1 // pred_fallthru
      _
    // Predicated region
    $region18: #{tpu_custom_call.1} parent=1 // pred_check
      _
    $region19: #{tpu_custom_call.1} parent=1 // pred_check_branch
      %50 = sbr.rel (0) target = $region21
    $region20: #{tpu_custom_call.1} parent=1 // pred_region
      _
    $region21: #{tpu_custom_call.1} parent=1 // pred_fallthru
      _
    // Predicated region
    $region22: #{tpu_custom_call.1} parent=1 // pred_check
      _
    $region23: #{tpu_custom_call.1} parent=1 // pred_check_branch
      %52 = sbr.rel (0) target = $region25
    $region24: #{tpu_custom_call.1} parent=1 // pred_region
      _
    $region25: #{tpu_custom_call.1} parent=1 // pred_fallthru
      _
    // Predicated region
    $region26: #{tpu_custom_call.1} parent=1 // pred_check
      _
    $region27: #{tpu_custom_call.1} parent=1 // pred_check_branch
      %54 = sbr.rel (0) target = $region29
    $region28: #{tpu_custom_call.1} parent=1 // pred_region
      %s56 = ssub.s32 2048, 2048
      %57 = vsyncadd [#allocation6], %s56
      %s58 = sshll.u32 [#allocation7], 4
      %s59 = int_to_ptr.vmem [resolvable:$true] %s58
      %64 = dma.hbm_to_vmem [thread:$0]  %s6, 2048, %s59, [#allocation6], 128, 128, 8
    $region29: #{tpu_custom_call.1} parent=1 // pred_fallthru
      _
    // Predicated region
    $region30: #{tpu_custom_call.1} parent=1 // pred_check
      _
    $region31: #{tpu_custom_call.1} parent=1 // pred_check_branch
      %66 = sbr.rel (0) target = $region33
    $region32: #{tpu_custom_call.1} parent=1 // pred_region
      %s68 = ssub.s32 4096, 4096
      %69 = vsyncadd [#allocation9], %s68
      %s70 = sshll.u32 [#allocation8], 4
      %s71 = int_to_ptr.vmem [resolvable:$true] %s70
      %76 = dma.hbm_to_vmem [thread:$0]  %s7, 4096, %s71, [#allocation9], 128, 128, 8
    $region33: #{tpu_custom_call.1} parent=1 // pred_fallthru
      _
    // Predicated region
    $region34: #{tpu_custom_call.1} parent=1 // pred_check
      _
    $region35: #{tpu_custom_call.1} parent=1 // pred_check_branch
      %78 = sbr.rel (0) target = $region37
    $region36: #{tpu_custom_call.1} parent=1 // pred_region
      _
    $region37: #{tpu_custom_call.1} parent=1 // pred_fallthru
      _
    // Predicated region
    $region38: #{tpu_custom_call.1} parent=1 // pred_check
      _
    $region39: #{tpu_custom_call.1} parent=1 // pred_check_branch
      %80 = sbr.rel (0) target = $region41
    $region40: #{tpu_custom_call.1} parent=1 // pred_region
      %81 = dma.done [#allocation3], 256
    $region41: #{tpu_custom_call.1} parent=1 // pred_fallthru
      _
    // Predicated region
    $region42: #{tpu_custom_call.1} parent=1 // pred_check
      _
    $region43: #{tpu_custom_call.1} parent=1 // pred_check_branch
      %83 = sbr.rel (0) target = $region45
    $region44: #{tpu_custom_call.1} parent=1 // pred_region
      %84 = dma.done [#allocation6], 512
    $region45: #{tpu_custom_call.1} parent=1 // pred_fallthru
      _
    // Predicated region
    $region46: #{tpu_custom_call.1} parent=1 // pred_check
      _
    $region47: #{tpu_custom_call.1} parent=1 // pred_check_branch
      %86 = sbr.rel (0) target = $region49
    $region48: #{tpu_custom_call.1} parent=1 // pred_region
      %87 = dma.done [#allocation6], 2048
    $region49: #{tpu_custom_call.1} parent=1 // pred_fallthru
      _
    // Predicated region
    $region50: #{tpu_custom_call.1} parent=1 // pred_check
      _
    $region51: #{tpu_custom_call.1} parent=1 // pred_check_branch
      %89 = sbr.rel (0) target = $region53
    $region52: #{tpu_custom_call.1} parent=1 // pred_region
      %90 = dma.done [#allocation9], 4096
    $region53: #{tpu_custom_call.1} parent=1 // pred_fallthru
      _
    %v91 = vld [vmem:[#allocation2] sm:$0xff]
    %v92 = vld [vmem:[#allocation2 + $0x8] sm:$0xff]
    %93 = vst [vmem:[#allocation11] sm:$0xff] %v91
    %94 = vst [vmem:[#allocation11 + $0x18] sm:$0xff] %v92
    %v95 = vld [vmem:[#allocation5] sm:$0xff]
    %v96 = vld [vmem:[#allocation5 + $0x8] sm:$0xff]
    %v97 = vld [vmem:[#allocation5 + $0x10] sm:$0xff]
    %v98 = vld [vmem:[#allocation5 + $0x18] sm:$0xff]
    %99 = vst [vmem:[#allocation11 + $0x8] sm:$0xff] %v95
    %100 = vst [vmem:[#allocation11 + $0x10] sm:$0xff] %v96
    %101 = vst [vmem:[#allocation11 + $0x20] sm:$0xff] %v97
    %102 = vst [vmem:[#allocation11 + $0x28] sm:$0xff] %v98
    %v103 = vld [vmem:[#allocation2] sm:$0xff]
    %v104 = vld [vmem:[#allocation2 + $0x8] sm:$0xff]
    %v105 = vld [vmem:[#allocation5] sm:$0xff]
    %v106 = vld [vmem:[#allocation5 + $0x8] sm:$0xff]
    %v107 = vld [vmem:[#allocation5 + $0x10] sm:$0xff]
    %v108 = vld [vmem:[#allocation5 + $0x18] sm:$0xff]
    %109 = vadd.xlane.f32.xlu0 %v103
    %v110 = vpop.xlane.xlu0 %109
    %111 = vadd.xlane.f32.xlu0 %v104
    %v112 = vpop.xlane.xlu0 %111
    %v113 = vadd.f32 %v105, %v106
    %114 = vadd.xlane.f32.xlu0 %v113
    %v115 = vpop.xlane.xlu0 %114
    %v116 = vadd.f32 %v107, %v108
    %117 = vadd.xlane.f32.xlu0 %v116
    %v118 = vpop.xlane.xlu0 %117
    %v119 = vadd.f32 %v110, %v115
    %v120 = vadd.f32 %v112, %v118
    %v121 = vmul.f32 %v103, %v103
    %v122 = vmul.f32 %v104, %v104
    %123 = vadd.xlane.f32.xlu0 %v121
    %v124 = vpop.xlane.xlu0 %123
    %125 = vadd.xlane.f32.xlu0 %v122
    %v126 = vpop.xlane.xlu0 %125
    %v127 = vmul.f32 %v105, %v105
    %v128 = vmul.f32 %v106, %v106
    %v129 = vmul.f32 %v107, %v107
    %v130 = vmul.f32 %v108, %v108
    %v131 = vadd.f32 %v127, %v128
    %132 = vadd.xlane.f32.xlu0 %v131
    %v133 = vpop.xlane.xlu0 %132
    %v134 = vadd.f32 %v129, %v130
    %135 = vadd.xlane.f32.xlu0 %v134
    %v136 = vpop.xlane.xlu0 %135
    %v137 = vadd.f32 %v124, %v133
    %v138 = vadd.f32 %v126, %v136
    %v139 = vmul.f32 %v119, 0.0026041667
    %v140 = vmul.f32 %v120, 0.0026041667
    %v141 = vmul.f32 %v137, 0.0026041667
    %v142 = vmul.f32 %v138, 0.0026041667
    %v143 = vmul.f32 %v139, %v139
    %v144 = vmul.f32 %v140, %v140
    %v145 = vsub.f32 %v141, %v143
    %v146 = vsub.f32 %v142, %v144
    %v147 = vmax.f32 %v145, 0.0
    %v148 = vmax.f32 %v146, 0.0
    %v149 = vadd.f32 %v147, 1e-05
    %v150 = vadd.f32 %v148, 1e-05
    %v151 = vrsqrt.pop %v149
    %v152 = vrsqrt.pop %v150
    %v153 = vsub.f32 %v103, %v139
    %v154 = vsub.f32 %v104, %v140
    %v155 = vmul.f32 %v153, %v151
    %v156 = vmul.f32 %v154, %v152
    %v157 = vld [vmem:[%s2] sm:$0x1]
    %v159 = vlaneseq
    %v160 = vshrl.u32 %v159, 7
    %v161 = vsub.s32 0, %v160
    %v162 = vrot.slane %v157, %v161
    %v164 = vmul.f32 %v155, %v162
    %v165 = vmul.f32 %v156, %v162
    %v166 = vld [vmem:[%s4] sm:$0x1]
    %v168 = vlaneseq
    %v169 = vshrl.u32 %v168, 7
    %v170 = vsub.s32 0, %v169
    %v171 = vrot.slane %v166, %v170
    %v173 = vadd.f32 %v164, %v171
    %v174 = vadd.f32 %v165, %v171
    %v175 = vsub.f32 %v105, %v139
    %v176 = vsub.f32 %v106, %v139
    %v177 = vsub.f32 %v107, %v140
    %v178 = vsub.f32 %v108, %v140
    %v179 = vmul.f32 %v175, %v151
    %v180 = vmul.f32 %v176, %v151
    %v181 = vmul.f32 %v177, %v152
    %v182 = vmul.f32 %v178, %v152
    %v183 = vld [vmem:[%s3] sm:$0x3]
    %v185 = vlaneseq
    %v186 = vshrl.u32 %v185, 7
    %v187 = vsub.s32 0, %v186
    %v188 = vrot.slane %v183, %v187
    %v189 = vlaneseq
    %v190 = vshrl.u32 %v189, 7
    %v191 = vsub.s32 1, %v190
    %v192 = vrot.slane %v183, %v191
    %v195 = vmul.f32 %v179, %v188
    %v196 = vmul.f32 %v180, %v192
    %v197 = vmul.f32 %v181, %v188
    %v198 = vmul.f32 %v182, %v192
    %v199 = vld [vmem:[%s5] sm:$0x3]
    %v201 = vlaneseq
    %v202 = vshrl.u32 %v201, 7
    %v203 = vsub.s32 0, %v202
    %v204 = vrot.slane %v199, %v203
    %v205 = vlaneseq
    %v206 = vshrl.u32 %v205, 7
    %v207 = vsub.s32 1, %v206
    %v208 = vrot.slane %v199, %v207
    %v211 = vadd.f32 %v195, %v204
    %v212 = vadd.f32 %v196, %v208
    %v213 = vadd.f32 %v197, %v204
    %v214 = vadd.f32 %v198, %v208
    %v215 = vld [vmem:[#allocation7] sm:$0xff]
    %v216 = vld [vmem:[#allocation7 + $0x8] sm:$0xff]
    %v217 = vld [vmem:[#allocation7 + $0x10] sm:$0xff]
    %v218 = vld [vmem:[#allocation7 + $0x18] sm:$0xff]
    %v219 = vld [vmem:[#allocation7 + $0x20] sm:$0xff]
    %v220 = vld [vmem:[#allocation7 + $0x28] sm:$0xff]
    %v221 = vld [vmem:[#allocation7 + $0x30] sm:$0xff]
    %v222 = vld [vmem:[#allocation7 + $0x38] sm:$0xff]
    %v223 = vld [vmem:[#allocation7 + $0x40] sm:$0xff]
    %v224 = vld [vmem:[#allocation7 + $0x48] sm:$0xff]
    %v225 = vld [vmem:[#allocation7 + $0x50] sm:$0xff]
    %v226 = vld [vmem:[#allocation7 + $0x58] sm:$0xff]
    %v227 = vld [vmem:[#allocation7 + $0x60] sm:$0xff]
    %v228 = vld [vmem:[#allocation7 + $0x68] sm:$0xff]
    %v229 = vld [vmem:[#allocation7 + $0x70] sm:$0xff]
    %v230 = vld [vmem:[#allocation7 + $0x78] sm:$0xff]
    %v231 = vld [vmem:[#allocation8] sm:$0xff]
    %v232 = vld [vmem:[#allocation8 + $0x8] sm:$0xff]
    %v233 = vld [vmem:[#allocation8 + $0x10] sm:$0xff]
    %v234 = vld [vmem:[#allocation8 + $0x18] sm:$0xff]
    %v235 = vld [vmem:[#allocation8 + $0x20] sm:$0xff]
    %v236 = vld [vmem:[#allocation8 + $0x28] sm:$0xff]
    %v237 = vld [vmem:[#allocation8 + $0x30] sm:$0xff]
    %v238 = vld [vmem:[#allocation8 + $0x38] sm:$0xff]
    %v239 = vld [vmem:[#allocation8 + $0x40] sm:$0xff]
    %v240 = vld [vmem:[#allocation8 + $0x48] sm:$0xff]
    %v241 = vld [vmem:[#allocation8 + $0x50] sm:$0xff]
    %v242 = vld [vmem:[#allocation8 + $0x58] sm:$0xff]
    %v243 = vld [vmem:[#allocation8 + $0x60] sm:$0xff]
    %v244 = vld [vmem:[#allocation8 + $0x68] sm:$0xff]
    %v245 = vld [vmem:[#allocation8 + $0x70] sm:$0xff]
    %v246 = vld [vmem:[#allocation8 + $0x78] sm:$0xff]
    %v247 = vld [vmem:[#allocation8 + $0x80] sm:$0xff]
    %v248 = vld [vmem:[#allocation8 + $0x88] sm:$0xff]
    %v249 = vld [vmem:[#allocation8 + $0x90] sm:$0xff]
    %v250 = vld [vmem:[#allocation8 + $0x98] sm:$0xff]
    %v251 = vld [vmem:[#allocation8 + $0xa0] sm:$0xff]
    %v252 = vld [vmem:[#allocation8 + $0xa8] sm:$0xff]
    %v253 = vld [vmem:[#allocation8 + $0xb0] sm:$0xff]
    %v254 = vld [vmem:[#allocation8 + $0xb8] sm:$0xff]
    %v255 = vld [vmem:[#allocation8 + $0xc0] sm:$0xff]
    %v256 = vld [vmem:[#allocation8 + $0xc8] sm:$0xff]
    %v257 = vld [vmem:[#allocation8 + $0xd0] sm:$0xff]
    %v258 = vld [vmem:[#allocation8 + $0xd8] sm:$0xff]
    %v259 = vld [vmem:[#allocation8 + $0xe0] sm:$0xff]
    %v260 = vld [vmem:[#allocation8 + $0xe8] sm:$0xff]
    %v261 = vld [vmem:[#allocation8 + $0xf0] sm:$0xff]
    %v262 = vld [vmem:[#allocation8 + $0xf8] sm:$0xff]
    %263 = vmatprep.subr.mxu0 0.0
    %264 = vmatpush1.msra.mxu0 %v246
    %265 = vmatprep.subr.mxu0 0.0
    %266 = vmatpush1.msra.mxu0 %v245
    %267 = vmatprep.subr.mxu0 0.0
    %268 = vmatpush1.msra.mxu0 %v244
    %269 = vmatprep.subr.mxu0 0.0
    %270 = vmatpush1.msra.mxu0 %v243
    %271 = vmatprep.subr.mxu0 0.0
    %272 = vmatpush1.msra.mxu0 %v242
    %273 = vmatprep.subr.mxu0 0.0
    %274 = vmatpush1.msra.mxu0 %v241
    %275 = vmatprep.subr.mxu0 0.0
    %276 = vmatpush1.msra.mxu0 %v240
    %277 = vmatprep.subr.mxu0 0.0
    %278 = vmatpush1.msra.mxu0 %v239
    %279 = vmatprep.subr.mxu0 0.0
    %280 = vmatpush1.msra.mxu0 %v238
    %281 = vmatprep.subr.mxu0 0.0
    %282 = vmatpush1.msra.mxu0 %v237
    %283 = vmatprep.subr.mxu0 0.0
    %284 = vmatpush1.msra.mxu0 %v236
    %285 = vmatprep.subr.mxu0 0.0
    %286 = vmatpush1.msra.mxu0 %v235
    %287 = vmatprep.subr.mxu0 0.0
    %288 = vmatpush1.msra.mxu0 %v234
    %289 = vmatprep.subr.mxu0 0.0
    %290 = vmatpush1.msra.mxu0 %v233
    %291 = vmatprep.subr.mxu0 0.0
    %292 = vmatpush1.msra.mxu0 %v232
    %293 = vmatprep.subr.mxu0 0.0
    %294 = vmatpush1.msra.mxu0 %v231
    %295 = vmatprep.subr.mxu0 0.0
    %296 = vmatpush2.msra.mxu0 %v262
    %297 = vmatprep.subr.mxu0 0.0
    %298 = vmatpush2.msra.mxu0 %v261
    %299 = vmatprep.subr.mxu0 0.0
    %300 = vmatpush2.msra.mxu0 %v260
    %301 = vmatprep.subr.mxu0 0.0
    %302 = vmatpush2.msra.mxu0 %v259
    %303 = vmatprep.subr.mxu0 0.0
    %304 = vmatpush2.msra.mxu0 %v258
    %305 = vmatprep.subr.mxu0 0.0
    %306 = vmatpush2.msra.mxu0 %v257
    %307 = vmatprep.subr.mxu0 0.0
    %308 = vmatpush2.msra.mxu0 %v256
    %309 = vmatprep.subr.mxu0 0.0
    %310 = vmatpush2.msra.mxu0 %v255
    %311 = vmatprep.subr.mxu0 0.0
    %312 = vmatpush2.msra.mxu0 %v254
    %313 = vmatprep.subr.mxu0 0.0
    %314 = vmatpush2.msra.mxu0 %v253
    %315 = vmatprep.subr.mxu0 0.0
    %316 = vmatpush2.msra.mxu0 %v252
    %317 = vmatprep.subr.mxu0 0.0
    %318 = vmatpush2.msra.mxu0 %v251
    %319 = vmatprep.subr.mxu0 0.0
    %320 = vmatpush2.msra.mxu0 %v250
    %321 = vmatprep.subr.mxu0 0.0
    %322 = vmatpush2.msra.mxu0 %v249
    %323 = vmatprep.subr.mxu0 0.0
    %324 = vmatpush2.msra.mxu0 %v248
    %325 = vmatprep.subr.mxu0 0.0
    %326 = vmatpush2.msra.mxu0 %v247
    %327 = vmatprep.mubr.f32.mxu0 %v212
    %328 = vmatmul.mubr.f32.gmra.mxu0 %v211
    %v329 = vpop.f32.mrf.mxu0
    %v330 = vadd.f32 0.0, %v329
    %v331 = vpop.f32.mrf.mxu0
    %332 = vmatprep.mubr.f32.mxu0 %v214
    %333 = vmatmul.mubr.f32.gmra.mxu0 %v213
    %v334 = vpop.f32.mrf.mxu0
    %v335 = vadd.f32 0.0, %v334
    %v336 = vpop.f32.mrf.mxu0
    %337 = vdwg.mxu0
    %338 = vmatprep.subr.mxu0 0.0
    %339 = vmatpush1.msra.mxu0 %v230
    %340 = vmatprep.subr.mxu0 0.0
    %341 = vmatpush1.msra.mxu0 %v229
    %342 = vmatprep.subr.mxu0 0.0
    %343 = vmatpush1.msra.mxu0 %v228
    %344 = vmatprep.subr.mxu0 0.0
    %345 = vmatpush1.msra.mxu0 %v227
    %346 = vmatprep.subr.mxu0 0.0
    %347 = vmatpush1.msra.mxu0 %v226
    %348 = vmatprep.subr.mxu0 0.0
    %349 = vmatpush1.msra.mxu0 %v225
    %350 = vmatprep.subr.mxu0 0.0
    %351 = vmatpush1.msra.mxu0 %v224
    %352 = vmatprep.subr.mxu0 0.0
    %353 = vmatpush1.msra.mxu0 %v223
    %354 = vmatprep.subr.mxu0 0.0
    %355 = vmatpush1.msra.mxu0 %v222
    %356 = vmatprep.subr.mxu0 0.0
    %357 = vmatpush1.msra.mxu0 %v221
    %358 = vmatprep.subr.mxu0 0.0
    %359 = vmatpush1.msra.mxu0 %v220
    %360 = vmatprep.subr.mxu0 0.0
    %361 = vmatpush1.msra.mxu0 %v219
    %362 = vmatprep.subr.mxu0 0.0
    %363 = vmatpush1.msra.mxu0 %v218
    %364 = vmatprep.subr.mxu0 0.0
    %365 = vmatpush1.msra.mxu0 %v217
    %366 = vmatprep.subr.mxu0 0.0
    %367 = vmatpush1.msra.mxu0 %v216
    %368 = vmatprep.subr.mxu0 0.0
    %369 = vmatpush1.msra.mxu0 %v215
    %370 = vmatprep.subr.mxu0 0.0
    %371 = vmatpush2.msra.mxu0 0.0
    %372 = vmatprep.subr.mxu0 0.0
    %373 = vmatpush2.msra.mxu0 0.0
    %374 = vmatprep.subr.mxu0 0.0
    %375 = vmatpush2.msra.mxu0 0.0
    %376 = vmatprep.subr.mxu0 0.0
    %377 = vmatpush2.msra.mxu0 0.0
    %378 = vmatprep.subr.mxu0 0.0
    %379 = vmatpush2.msra.mxu0 0.0
    %380 = vmatprep.subr.mxu0 0.0
    %381 = vmatpush2.msra.mxu0 0.0
    %382 = vmatprep.subr.mxu0 0.0
    %383 = vmatpush2.msra.mxu0 0.0
    %384 = vmatprep.subr.mxu0 0.0
    %385 = vmatpush2.msra.mxu0 0.0
    %386 = vmatprep.subr.mxu0 0.0
    %387 = vmatpush2.msra.mxu0 0.0
    %388 = vmatprep.subr.mxu0 0.0
    %389 = vmatpush2.msra.mxu0 0.0
    %390 = vmatprep.subr.mxu0 0.0
    %391 = vmatpush2.msra.mxu0 0.0
    %392 = vmatprep.subr.mxu0 0.0
    %393 = vmatpush2.msra.mxu0 0.0
    %394 = vmatprep.subr.mxu0 0.0
    %395 = vmatpush2.msra.mxu0 0.0
    %396 = vmatprep.subr.mxu0 0.0
    %397 = vmatpush2.msra.mxu0 0.0
    %398 = vmatprep.subr.mxu0 0.0
    %399 = vmatpush2.msra.mxu0 0.0
    %400 = vmatprep.subr.mxu0 0.0
    %401 = vmatpush2.msra.mxu0 0.0
    %402 = vmatprep.mubr.f32.mxu0 0.0
    %403 = vmatmul.mubr.f32.gmra.mxu0 %v173
    %v404 = vpop.f32.mrf.mxu0
    %v405 = vadd.f32 %v330, %v404
    %v406 = vpop.f32.mrf.mxu0
    %407 = vmatprep.mubr.f32.mxu0 0.0
    %408 = vmatmul.mubr.f32.gmra.mxu0 %v174
    %v409 = vpop.f32.mrf.mxu0
    %v410 = vadd.f32 %v335, %v409
    %v411 = vpop.f32.mrf.mxu0
    %412 = vdwg.mxu0
    %v413 = vld [vmem:[%s8] sm:$0x1]
    %v415 = vlaneseq
    %v416 = vshrl.u32 %v415, 7
    %v417 = vsub.s32 0, %v416
    %v418 = vrot.slane %v413, %v417
    %v420 = vadd.f32 %v405, %v418
    %v421 = vadd.f32 %v410, %v418
    %422 = vst [vmem:[#allocation10] sm:$0xff] %v420
    %423 = vst [vmem:[#allocation10 + $0x8] sm:$0xff] %v421
    // Predicated region
    $region54: #{tpu_custom_call.1} parent=1 // pred_check
      _
    $region55: #{tpu_custom_call.1} parent=1 // pred_check_branch
      %425 = sbr.rel (0) target = $region57
    $region56: #{tpu_custom_call.1} parent=1 // pred_region
      %s427 = ssub.s32 256, 256
      %428 = vsyncadd [#allocation4], %s427
      %s429 = sshll.u32 [#allocation10], 4
      %s430 = int_to_ptr.vmem [resolvable:$true] %s429
      %435 = dma.vmem_to_hbm [thread:$0]  %s430, 256, %s9, [#allocation4], 128, 128, 8
    $region57: #{tpu_custom_call.1} parent=1 // pred_fallthru
      _
    // Predicated region
    $region58: #{tpu_custom_call.1} parent=1 // pred_check
      _
    $region59: #{tpu_custom_call.1} parent=1 // pred_check_branch
      %437 = sbr.rel (0) target = $region61
    $region60: #{tpu_custom_call.1} parent=1 // pred_region
      %s439 = ssub.s32 768, 768
      %440 = vsyncadd [#allocation12], %s439
      %s441 = sshll.u32 [#allocation11], 4
      %s442 = int_to_ptr.vmem [resolvable:$true] %s441
      %447 = dma.vmem_to_hbm [thread:$0]  %s442, 768, %s10, [#allocation12], 384, 384, 24
    $region61: #{tpu_custom_call.1} parent=1 // pred_fallthru
      _
    // Predicated region
    $region62: #{tpu_custom_call.1} parent=1 // pred_check
      _
    $region63: #{tpu_custom_call.1} parent=1 // pred_check_branch
      %449 = sbr.rel (0) target = $region65
    $region64: #{tpu_custom_call.1} parent=1 // pred_region
      %450 = dma.done [#allocation4], 256
    $region65: #{tpu_custom_call.1} parent=1 // pred_fallthru
      _
    // Predicated region
    $region66: #{tpu_custom_call.1} parent=1 // pred_check
      _
    $region67: #{tpu_custom_call.1} parent=1 // pred_check_branch
      %452 = sbr.rel (0) target = $region69
    $region68: #{tpu_custom_call.1} parent=1 // pred_region
      %453 = dma.done [#allocation12], 768
    $region69: #{tpu_custom_call.1} parent=1 // pred_fallthru
      _
    %454 = vsyncpa [#allocation3], 1
    %455 = vsyncpa [#allocation6], 1
    %456 = vsyncpa [#allocation9], 1
    %457 = vsyncpa [#allocation4], 1
    %458 = vsyncpa [#allocation12], 1

</llo_original>
